<compile_context>
chip_gen: v6e
topology: v6e:2x2x1
jax: 0.10.0
libtpu: 0.0.40
codegen_flags: <defaults>
</compile_context>

<pallas_src>
import functools

import jax
import jax.numpy as jnp
from jax import lax
from jax.experimental import pallas as pl
from jax.experimental.pallas import tpu as pltpu


# ----------------------------------------------------------------------------
# Fused kernel (one image per grid step)
# ----------------------------------------------------------------------------
def _bottleneck_v2_kernel(H, W, x_ref, rc_ref, s1_ref, b1_ref, w1_ref,
                          cb1_ref, w2_ref, cb2_ref, w3_ref, o_ref, col_ref):
    """Fused pre-activation bottleneck for one image.

    x_ref   : (1, Cin, H*W)   input (also the identity residual)
    rc_ref  : (2, H*W) int32  [row ; col] spatial index of each lane position
    s1_ref  : (Cin, 1)        BN1 scale
    b1_ref  : (Cin, 1)        BN1 bias
    w1_ref  : (P, Cin)        conv1 (1x1) weight with BN2 scale folded in
    cb1_ref : (P, 1)          BN2 bias
    w2_ref  : (P, 9*P)        conv2 (3x3) weight, im2col order, BN3 scale folded
    cb2_ref : (P, 1)          BN3 bias
    w3_ref  : (Cout, P)       conv3 (1x1) weight
    o_ref   : (1, Cout, H*W)  output
    col_ref : (9*P, H*W)      VMEM im2col scratch for the 3x3 conv
    """
    HW = H * W
    planes = w1_ref.shape[0]

    x = x_ref[0].astype(jnp.float32)                         # (Cin, HW)

    # --- BN1 + ReLU1 (pre-activation; residual stays the raw input x) ------
    t = jnp.maximum(x * s1_ref[...] + b1_ref[...], 0.0)

    # --- conv1 (1x1) + folded BN2 + ReLU2 ----------------------------------
    y1 = jnp.dot(w1_ref[...], t, preferred_element_type=jnp.float32)
    y1 = jnp.maximum(y1 + cb1_ref[...], 0.0)                 # (P, HW)

    # --- im2col for the 3x3/pad-1 conv via lane rolls + border masks -------
    row = rc_ref[0:1, :]                                     # (1, HW) int32
    col = rc_ref[1:2, :]
    for kh in range(3):
        for kw in range(3):
            dh, dw = kh - 1, kw - 1
            shift = (-(dh * W + dw)) % HW
            patch = pltpu.roll(y1, shift=shift, axis=1) if shift else y1
            conds = []
            if dh == -1:
                conds.append(row >= 1)
            elif dh == 1:
                conds.append(row < H - 1)
            if dw == -1:
                conds.append(col >= 1)
            elif dw == 1:
                conds.append(col < W - 1)
            if conds:
                m = conds[0]
                for c in conds[1:]:
                    m = m & c
                patch = jnp.where(m, patch, 0.0)
            t9 = kh * 3 + kw
            col_ref[t9 * planes:(t9 + 1) * planes, :] = patch

    # --- conv2 (3x3) as ONE fat matmul (K = 9*P) + folded BN3 + ReLU3 ------
    y2 = jnp.dot(w2_ref[...], col_ref[...],
                 preferred_element_type=jnp.float32)
    y2 = jnp.maximum(y2 + cb2_ref[...], 0.0)                 # (P, HW)

    # --- conv3 (1x1) + identity residual (no final ReLU in V2) -------------
    y3 = jnp.dot(w3_ref[...], y2, preferred_element_type=jnp.float32)
    o_ref[0] = (y3 + x).astype(o_ref.dtype)


# ----------------------------------------------------------------------------
# Wrapper
# ----------------------------------------------------------------------------
def _fold_bn(gamma, beta, mean, var, eps=1e-5):
    scale = gamma / jnp.sqrt(var + eps)
    bias = beta - mean * scale
    return scale, bias


@jax.jit
def bottleneck_v2(x_nchw, params):
    """BottleneckV2 forward, stride=1, downsample=None (identity shortcut)."""
    N, cin, H, W = x_nchw.shape
    HW = H * W
    planes = params["conv1_w"].shape[0]
    cout = params["conv3_w"].shape[0]
    assert cout == cin, "identity shortcut needs inplanes == planes*expansion"
    # TODO(synk): stride > 1 and the downsample() shortcut are not implemented
    # (the default-constructed block uses stride=1, downsample=None).

    s1, b1 = _fold_bn(params["bn1_gamma"], params["bn1_beta"],
                      params["bn1_mean"], params["bn1_var"])
    s2, b2 = _fold_bn(params["bn2_gamma"], params["bn2_beta"],
                      params["bn2_mean"], params["bn2_var"])
    s3, b3 = _fold_bn(params["bn3_gamma"], params["bn3_beta"],
                      params["bn3_mean"], params["bn3_var"])

    # Conv weights in matmul layout; BN2/BN3 scales folded into conv1/conv2.
    w1 = params["conv1_w"][:, :, 0, 0] * s2[:, None]                 # (P, Cin)
    w2 = jnp.transpose(params["conv2_w"], (0, 2, 3, 1)).reshape(planes,
                                                                9 * planes)
    w2 = w2 * s3[:, None]                                            # (P, 9P)
    w3 = params["conv3_w"][:, :, 0, 0]                               # (Cout, P)

    # Channels on sublanes, flattened spatial on lanes (lane-dense, free
    # reshape from NCHW).
    x = x_nchw.reshape(N, cin, HW)

    hw = jnp.arange(HW, dtype=jnp.int32)
    rowcol = jnp.stack([hw // W, hw % W], axis=0)                    # (2, HW)

    kernel = functools.partial(_bottleneck_v2_kernel, H, W)
    out = pl.pallas_call(
        kernel,
        out_shape=jax.ShapeDtypeStruct((N, cout, HW), x_nchw.dtype),
        grid_spec=pltpu.PrefetchScalarGridSpec(
            num_scalar_prefetch=0,
            grid=(N,),
            in_specs=[
                pl.BlockSpec((1, cin, HW), lambda b: (b, 0, 0)),     # x
                pl.BlockSpec((2, HW), lambda b: (0, 0)),             # rowcol
                pl.BlockSpec((cin, 1), lambda b: (0, 0)),            # BN1 scale
                pl.BlockSpec((cin, 1), lambda b: (0, 0)),            # BN1 bias
                pl.BlockSpec((planes, cin), lambda b: (0, 0)),       # w1
                pl.BlockSpec((planes, 1), lambda b: (0, 0)),         # BN2 bias
                pl.BlockSpec((planes, 9 * planes), lambda b: (0, 0)),  # w2
                pl.BlockSpec((planes, 1), lambda b: (0, 0)),         # BN3 bias
                pl.BlockSpec((cout, planes), lambda b: (0, 0)),      # w3
            ],
            out_specs=pl.BlockSpec((1, cout, HW), lambda b: (b, 0, 0)),
            scratch_shapes=[pltpu.VMEM((9 * planes, HW), jnp.float32)],
        ),
        compiler_params=pltpu.CompilerParams(
            dimension_semantics=("parallel",)),
    )(x, rowcol, s1[:, None], b1[:, None], w1, b2[:, None], w2, b3[:, None],
      w3)

    return out.reshape(N, cout, H, W)


# ----------------------------------------------------------------------------
# Pure-JAX reference (mirrors the PyTorch module)
# ----------------------------------------------------------------------------
def _ref_forward(x, params, eps=1e-5):
    def bn(t, g, b, m, v):
        sh = (1, -1, 1, 1)
        return ((t - m.reshape(sh)) / jnp.sqrt(v.reshape(sh) + eps)
                * g.reshape(sh) + b.reshape(sh))

    def conv(t, w, pad):
        return lax.conv_general_dilated(
            t, w, window_strides=(1, 1), padding=((pad, pad), (pad, pad)),
            dimension_numbers=("NCHW", "OIHW", "NCHW"))

    out = jnp.maximum(bn(x, params["bn1_gamma"], params["bn1_beta"],
                         params["bn1_mean"], params["bn1_var"]), 0.0)
    out = conv(out, params["conv1_w"], 0)
    out = jnp.maximum(bn(out, params["bn2_gamma"], params["bn2_beta"],
                         params["bn2_mean"], params["bn2_var"]), 0.0)
    out = conv(out, params["conv2_w"], 1)
    out = jnp.maximum(bn(out, params["bn3_gamma"], params["bn3_beta"],
                         params["bn3_mean"], params["bn3_var"]), 0.0)
    out = conv(out, params["conv3_w"], 0)
    return out + x


# ----------------------------------------------------------------------------
# Main
# ----------------------------------------------------------------------------
if __name__ == "__main__":
    key = jax.random.PRNGKey(0)
    planes = 4
    expansion = 4
    inplanes = planes * expansion          # identity shortcut => inplanes = 16
    N, H, W = 2, 16, 16
    ks = jax.random.split(key, 16)

    x = jax.random.normal(ks[0], (N, inplanes, H, W), jnp.float32)

    def bn_params(prefix, c, base):
        return {
            f"{prefix}_gamma": 1.0 + 0.1 * jax.random.normal(
                ks[base], (c,), jnp.float32),
            f"{prefix}_beta": 0.1 * jax.random.normal(
                ks[base + 1], (c,), jnp.float32),
            f"{prefix}_mean": 0.1 * jax.random.normal(
                ks[base + 2], (c,), jnp.float32),
            f"{prefix}_var": 1.0 + 0.1 * jnp.abs(
                jax.random.normal(ks[base + 3], (c,), jnp.float32)),
        }

    params = {
        "conv1_w": 0.2 * jax.random.normal(
            ks[1], (planes, inplanes, 1, 1), jnp.float32),
        "conv2_w": 0.2 * jax.random.normal(
            ks[2], (planes, planes, 3, 3), jnp.float32),
        "conv3_w": 0.2 * jax.random.normal(
            ks[3], (inplanes, planes, 1, 1), jnp.float32),
    }
    params.update(bn_params("bn1", inplanes, 4))
    params.update(bn_params("bn2", planes, 8))
    params.update(bn_params("bn3", planes, 12))

    out = bottleneck_v2(x, params)
    out = jax.block_until_ready(out)

    ref = _ref_forward(x, params)
    assert out.shape == (N, inplanes, H, W)
    assert jnp.allclose(out, ref, atol=1e-4, rtol=1e-4), (
        "mismatch vs reference: max abs err "
        f"{jnp.max(jnp.abs(out - ref)):.3e}")

    print("KERNEL_OK")
</pallas_src>

<mosaic_0001>
module attributes {stable_mosaic.version = 11 : i64} {
  func.func @_bottleneck_v2_kernel(%arg0: i32, %arg1: memref<1x16x256xf32, #tpu.memory_space<vmem>>, %arg2: memref<2x256xi32, #tpu.memory_space<vmem>>, %arg3: memref<16x1xf32, #tpu.memory_space<vmem>>, %arg4: memref<16x1xf32, #tpu.memory_space<vmem>>, %arg5: memref<4x16xf32, #tpu.memory_space<vmem>>, %arg6: memref<4x1xf32, #tpu.memory_space<vmem>>, %arg7: memref<4x36xf32, #tpu.memory_space<vmem>>, %arg8: memref<4x1xf32, #tpu.memory_space<vmem>>, %arg9: memref<16x4xf32, #tpu.memory_space<vmem>>, %arg10: memref<1x16x256xf32, #tpu.memory_space<vmem>>, %arg11: memref<36x256xf32, #tpu.memory_space<vmem>>) attributes {dimension_semantics = [#tpu.dimension_semantics<parallel>], iteration_bounds = array<i64: 2>, scalar_prefetch = 0 : i64, scratch_operands = 1 : i64, tpu.core_type = #tpu.core_type<tc>, window_params = [{transform_indices = @transform_0, window_bounds = array<i64: 1, 16, 256>}, {pipeline_mode = #tpu.pipeline_mode<synchronous>, transform_indices = @transform_1, window_bounds = array<i64: 2, 256>}, {pipeline_mode = #tpu.pipeline_mode<synchronous>, transform_indices = @transform_2, window_bounds = array<i64: 16, 1>}, {pipeline_mode = #tpu.pipeline_mode<synchronous>, transform_indices = @transform_3, window_bounds = array<i64: 16, 1>}, {pipeline_mode = #tpu.pipeline_mode<synchronous>, transform_indices = @transform_4, window_bounds = array<i64: 4, 16>}, {pipeline_mode = #tpu.pipeline_mode<synchronous>, transform_indices = @transform_5, window_bounds = array<i64: 4, 1>}, {pipeline_mode = #tpu.pipeline_mode<synchronous>, transform_indices = @transform_6, window_bounds = array<i64: 4, 36>}, {pipeline_mode = #tpu.pipeline_mode<synchronous>, transform_indices = @transform_7, window_bounds = array<i64: 4, 1>}, {pipeline_mode = #tpu.pipeline_mode<synchronous>, transform_indices = @transform_8, window_bounds = array<i64: 16, 4>}, {transform_indices = @transform_9, window_bounds = array<i64: 1, 16, 256>}]} {
    %c0 = arith.constant 0 : index
    %c0_0 = arith.constant 0 : index
    %c0_1 = arith.constant 0 : index
    %0 = vector.load %arg1[%c0, %c0_0, %c0_1] : memref<1x16x256xf32, #tpu.memory_space<vmem>>, vector<1x16x256xf32>
    %1 = vector.shape_cast %0 : vector<1x16x256xf32> to vector<16x256xf32>
    %c0_2 = arith.constant 0 : index
    %c0_3 = arith.constant 0 : index
    %2 = vector.load %arg3[%c0_2, %c0_3] : memref<16x1xf32, #tpu.memory_space<vmem>>, vector<16x1xf32>
    %3 = vector.broadcast %2 : vector<16x1xf32> to vector<16x256xf32>
    %4 = arith.mulf %1, %3 : vector<16x256xf32>
    %c0_4 = arith.constant 0 : index
    %c0_5 = arith.constant 0 : index
    %5 = vector.load %arg4[%c0_4, %c0_5] : memref<16x1xf32, #tpu.memory_space<vmem>>, vector<16x1xf32>
    %6 = vector.broadcast %5 : vector<16x1xf32> to vector<16x256xf32>
    %7 = arith.addf %4, %6 : vector<16x256xf32>
    %cst = arith.constant 0.000000e+00 : f32
    %8 = vector.broadcast %cst : f32 to vector<16x256xf32>
    %9 = arith.maximumf %7, %8 : vector<16x256xf32>
    %c0_6 = arith.constant 0 : index
    %c0_7 = arith.constant 0 : index
    %10 = vector.load %arg5[%c0_6, %c0_7] : memref<4x16xf32, #tpu.memory_space<vmem>>, vector<4x16xf32>
    %cst_8 = arith.constant dense<0.000000e+00> : vector<4x256xf32>
    %11 = tpu.matmul %10, %9, %cst_8 {dimension_numbers = #tpu.dot_dimension_numbers<[1], [0], [0], [1], [0, 0, 1, 1], [], []>} : vector<4x16xf32>, vector<16x256xf32>, vector<4x256xf32> -> vector<4x256xf32>
    %c0_9 = arith.constant 0 : index
    %c0_10 = arith.constant 0 : index
    %12 = vector.load %arg6[%c0_9, %c0_10] : memref<4x1xf32, #tpu.memory_space<vmem>>, vector<4x1xf32>
    %13 = vector.broadcast %12 : vector<4x1xf32> to vector<4x256xf32>
    %14 = arith.addf %11, %13 : vector<4x256xf32>
    %cst_11 = arith.constant 0.000000e+00 : f32
    %15 = vector.broadcast %cst_11 : f32 to vector<4x256xf32>
    %16 = arith.maximumf %14, %15 : vector<4x256xf32>
    %c0_12 = arith.constant 0 : index
    %c0_13 = arith.constant 0 : index
    %17 = vector.load %arg2[%c0_12, %c0_13] : memref<2x256xi32, #tpu.memory_space<vmem>>, vector<1x256xi32>
    %c1 = arith.constant 1 : index
    %c0_14 = arith.constant 0 : index
    %18 = vector.load %arg2[%c1, %c0_14] : memref<2x256xi32, #tpu.memory_space<vmem>>, vector<1x256xi32>
    %c17_i32 = arith.constant 17 : i32
    %19 = tpu.dynamic_rotate %16 by %c17_i32 dim 1 : vector<4x256xf32>, i32 -> vector<4x256xf32>
    %c1_i32 = arith.constant 1 : i32
    %20 = vector.broadcast %c1_i32 : i32 to vector<1x256xi32>
    %21 = arith.cmpi sge, %17, %20 : vector<1x256xi32>
    %c1_i32_15 = arith.constant 1 : i32
    %22 = vector.broadcast %c1_i32_15 : i32 to vector<1x256xi32>
    %23 = arith.cmpi sge, %18, %22 : vector<1x256xi32>
    %24 = arith.andi %21, %23 : vector<1x256xi1>
    %cst_16 = arith.constant 0.000000e+00 : f32
    %25 = vector.shape_cast %24 : vector<1x256xi1> to vector<1x256xi1>
    %26 = vector.broadcast %25 : vector<1x256xi1> to vector<4x256xi1>
    %27 = vector.broadcast %cst_16 : f32 to vector<4x256xf32>
    %28 = arith.select %26, %19, %27 : vector<4x256xi1>, vector<4x256xf32>
    %c0_17 = arith.constant 0 : index
    %c0_18 = arith.constant 0 : index
    %29 = vector.load %arg11[%c0_17, %c0_18] : memref<36x256xf32, #tpu.memory_space<vmem>>, vector<4x256xf32>
    tpu.vector_store %arg11[%c0_17, %c0_18], %28 {strides = array<i32>} : memref<36x256xf32, #tpu.memory_space<vmem>>, vector<4x256xf32>,
    %c16_i32 = arith.constant 16 : i32
    %30 = tpu.dynamic_rotate %16 by %c16_i32 dim 1 : vector<4x256xf32>, i32 -> vector<4x256xf32>
    %c1_i32_19 = arith.constant 1 : i32
    %31 = vector.broadcast %c1_i32_19 : i32 to vector<1x256xi32>
    %32 = arith.cmpi sge, %17, %31 : vector<1x256xi32>
    %cst_20 = arith.constant 0.000000e+00 : f32
    %33 = vector.shape_cast %32 : vector<1x256xi1> to vector<1x256xi1>
    %34 = vector.broadcast %33 : vector<1x256xi1> to vector<4x256xi1>
    %35 = vector.broadcast %cst_20 : f32 to vector<4x256xf32>
    %36 = arith.select %34, %30, %35 : vector<4x256xi1>, vector<4x256xf32>
    %c4 = arith.constant 4 : index
    %c0_21 = arith.constant 0 : index
    %37 = vector.load %arg11[%c4, %c0_21] : memref<36x256xf32, #tpu.memory_space<vmem>>, vector<4x256xf32>
    tpu.vector_store %arg11[%c4, %c0_21], %36 {strides = array<i32>} : memref<36x256xf32, #tpu.memory_space<vmem>>, vector<4x256xf32>,
    %c15_i32 = arith.constant 15 : i32
    %38 = tpu.dynamic_rotate %16 by %c15_i32 dim 1 : vector<4x256xf32>, i32 -> vector<4x256xf32>
    %c1_i32_22 = arith.constant 1 : i32
    %39 = vector.broadcast %c1_i32_22 : i32 to vector<1x256xi32>
    %40 = arith.cmpi sge, %17, %39 : vector<1x256xi32>
    %c15_i32_23 = arith.constant 15 : i32
    %41 = vector.broadcast %c15_i32_23 : i32 to vector<1x256xi32>
    %42 = arith.cmpi slt, %18, %41 : vector<1x256xi32>
    %43 = arith.andi %40, %42 : vector<1x256xi1>
    %cst_24 = arith.constant 0.000000e+00 : f32
    %44 = vector.shape_cast %43 : vector<1x256xi1> to vector<1x256xi1>
    %45 = vector.broadcast %44 : vector<1x256xi1> to vector<4x256xi1>
    %46 = vector.broadcast %cst_24 : f32 to vector<4x256xf32>
    %47 = arith.select %45, %38, %46 : vector<4x256xi1>, vector<4x256xf32>
    %c8 = arith.constant 8 : index
    %c0_25 = arith.constant 0 : index
    %48 = vector.load %arg11[%c8, %c0_25] : memref<36x256xf32, #tpu.memory_space<vmem>>, vector<4x256xf32>
    tpu.vector_store %arg11[%c8, %c0_25], %47 {strides = array<i32>} : memref<36x256xf32, #tpu.memory_space<vmem>>, vector<4x256xf32>,
    %c1_i32_26 = arith.constant 1 : i32
    %49 = tpu.dynamic_rotate %16 by %c1_i32_26 dim 1 : vector<4x256xf32>, i32 -> vector<4x256xf32>
    %c1_i32_27 = arith.constant 1 : i32
    %50 = vector.broadcast %c1_i32_27 : i32 to vector<1x256xi32>
    %51 = arith.cmpi sge, %18, %50 : vector<1x256xi32>
    %cst_28 = arith.constant 0.000000e+00 : f32
    %52 = vector.shape_cast %51 : vector<1x256xi1> to vector<1x256xi1>
    %53 = vector.broadcast %52 : vector<1x256xi1> to vector<4x256xi1>
    %54 = vector.broadcast %cst_28 : f32 to vector<4x256xf32>
    %55 = arith.select %53, %49, %54 : vector<4x256xi1>, vector<4x256xf32>
    %c12 = arith.constant 12 : index
    %c0_29 = arith.constant 0 : index
    %56 = vector.load %arg11[%c12, %c0_29] : memref<36x256xf32, #tpu.memory_space<vmem>>, vector<4x256xf32>
    tpu.vector_store %arg11[%c12, %c0_29], %55 {strides = array<i32>} : memref<36x256xf32, #tpu.memory_space<vmem>>, vector<4x256xf32>,
    %c16 = arith.constant 16 : index
    %c0_30 = arith.constant 0 : index
    %57 = vector.load %arg11[%c16, %c0_30] : memref<36x256xf32, #tpu.memory_space<vmem>>, vector<4x256xf32>
    tpu.vector_store %arg11[%c16, %c0_30], %16 {strides = array<i32>} : memref<36x256xf32, #tpu.memory_space<vmem>>, vector<4x256xf32>,
    %c255_i32 = arith.constant 255 : i32
    %58 = tpu.dynamic_rotate %16 by %c255_i32 dim 1 : vector<4x256xf32>, i32 -> vector<4x256xf32>
    %c15_i32_31 = arith.constant 15 : i32
    %59 = vector.broadcast %c15_i32_31 : i32 to vector<1x256xi32>
    %60 = arith.cmpi slt, %18, %59 : vector<1x256xi32>
    %cst_32 = arith.constant 0.000000e+00 : f32
    %61 = vector.shape_cast %60 : vector<1x256xi1> to vector<1x256xi1>
    %62 = vector.broadcast %61 : vector<1x256xi1> to vector<4x256xi1>
    %63 = vector.broadcast %cst_32 : f32 to vector<4x256xf32>
    %64 = arith.select %62, %58, %63 : vector<4x256xi1>, vector<4x256xf32>
    %c20 = arith.constant 20 : index
    %c0_33 = arith.constant 0 : index
    %65 = vector.load %arg11[%c20, %c0_33] : memref<36x256xf32, #tpu.memory_space<vmem>>, vector<4x256xf32>
    tpu.vector_store %arg11[%c20, %c0_33], %64 {strides = array<i32>} : memref<36x256xf32, #tpu.memory_space<vmem>>, vector<4x256xf32>,
    %c241_i32 = arith.constant 241 : i32
    %66 = tpu.dynamic_rotate %16 by %c241_i32 dim 1 : vector<4x256xf32>, i32 -> vector<4x256xf32>
    %c15_i32_34 = arith.constant 15 : i32
    %67 = vector.broadcast %c15_i32_34 : i32 to vector<1x256xi32>
    %68 = arith.cmpi slt, %17, %67 : vector<1x256xi32>
    %c1_i32_35 = arith.constant 1 : i32
    %69 = vector.broadcast %c1_i32_35 : i32 to vector<1x256xi32>
    %70 = arith.cmpi sge, %18, %69 : vector<1x256xi32>
    %71 = arith.andi %68, %70 : vector<1x256xi1>
    %cst_36 = arith.constant 0.000000e+00 : f32
    %72 = vector.shape_cast %71 : vector<1x256xi1> to vector<1x256xi1>
    %73 = vector.broadcast %72 : vector<1x256xi1> to vector<4x256xi1>
    %74 = vector.broadcast %cst_36 : f32 to vector<4x256xf32>
    %75 = arith.select %73, %66, %74 : vector<4x256xi1>, vector<4x256xf32>
    %c24 = arith.constant 24 : index
    %c0_37 = arith.constant 0 : index
    %76 = vector.load %arg11[%c24, %c0_37] : memref<36x256xf32, #tpu.memory_space<vmem>>, vector<4x256xf32>
    tpu.vector_store %arg11[%c24, %c0_37], %75 {strides = array<i32>} : memref<36x256xf32, #tpu.memory_space<vmem>>, vector<4x256xf32>,
    %c240_i32 = arith.constant 240 : i32
    %77 = tpu.dynamic_rotate %16 by %c240_i32 dim 1 : vector<4x256xf32>, i32 -> vector<4x256xf32>
    %c15_i32_38 = arith.constant 15 : i32
    %78 = vector.broadcast %c15_i32_38 : i32 to vector<1x256xi32>
    %79 = arith.cmpi slt, %17, %78 : vector<1x256xi32>
    %cst_39 = arith.constant 0.000000e+00 : f32
    %80 = vector.shape_cast %79 : vector<1x256xi1> to vector<1x256xi1>
    %81 = vector.broadcast %80 : vector<1x256xi1> to vector<4x256xi1>
    %82 = vector.broadcast %cst_39 : f32 to vector<4x256xf32>
    %83 = arith.select %81, %77, %82 : vector<4x256xi1>, vector<4x256xf32>
    %c28 = arith.constant 28 : index
    %c0_40 = arith.constant 0 : index
    %84 = vector.load %arg11[%c28, %c0_40] : memref<36x256xf32, #tpu.memory_space<vmem>>, vector<4x256xf32>
    tpu.vector_store %arg11[%c28, %c0_40], %83 {strides = array<i32>} : memref<36x256xf32, #tpu.memory_space<vmem>>, vector<4x256xf32>,
    %c239_i32 = arith.constant 239 : i32
    %85 = tpu.dynamic_rotate %16 by %c239_i32 dim 1 : vector<4x256xf32>, i32 -> vector<4x256xf32>
    %c15_i32_41 = arith.constant 15 : i32
    %86 = vector.broadcast %c15_i32_41 : i32 to vector<1x256xi32>
    %87 = arith.cmpi slt, %17, %86 : vector<1x256xi32>
    %c15_i32_42 = arith.constant 15 : i32
    %88 = vector.broadcast %c15_i32_42 : i32 to vector<1x256xi32>
    %89 = arith.cmpi slt, %18, %88 : vector<1x256xi32>
    %90 = arith.andi %87, %89 : vector<1x256xi1>
    %cst_43 = arith.constant 0.000000e+00 : f32
    %91 = vector.shape_cast %90 : vector<1x256xi1> to vector<1x256xi1>
    %92 = vector.broadcast %91 : vector<1x256xi1> to vector<4x256xi1>
    %93 = vector.broadcast %cst_43 : f32 to vector<4x256xf32>
    %94 = arith.select %92, %85, %93 : vector<4x256xi1>, vector<4x256xf32>
    %c32 = arith.constant 32 : index
    %c0_44 = arith.constant 0 : index
    %95 = vector.load %arg11[%c32, %c0_44] : memref<36x256xf32, #tpu.memory_space<vmem>>, vector<4x256xf32>
    tpu.vector_store %arg11[%c32, %c0_44], %94 {strides = array<i32>} : memref<36x256xf32, #tpu.memory_space<vmem>>, vector<4x256xf32>,
    %c0_45 = arith.constant 0 : index
    %c0_46 = arith.constant 0 : index
    %96 = vector.load %arg7[%c0_45, %c0_46] : memref<4x36xf32, #tpu.memory_space<vmem>>, vector<4x36xf32>
    %c0_47 = arith.constant 0 : index
    %c0_48 = arith.constant 0 : index
    %97 = vector.load %arg11[%c0_47, %c0_48] : memref<36x256xf32, #tpu.memory_space<vmem>>, vector<36x256xf32>
    %cst_49 = arith.constant dense<0.000000e+00> : vector<4x256xf32>
    %98 = tpu.matmul %96, %97, %cst_49 {dimension_numbers = #tpu.dot_dimension_numbers<[1], [0], [0], [1], [0, 0, 1, 1], [], []>} : vector<4x36xf32>, vector<36x256xf32>, vector<4x256xf32> -> vector<4x256xf32>
    %c0_50 = arith.constant 0 : index
    %c0_51 = arith.constant 0 : index
    %99 = vector.load %arg8[%c0_50, %c0_51] : memref<4x1xf32, #tpu.memory_space<vmem>>, vector<4x1xf32>
    %100 = vector.broadcast %99 : vector<4x1xf32> to vector<4x256xf32>
    %101 = arith.addf %98, %100 : vector<4x256xf32>
    %cst_52 = arith.constant 0.000000e+00 : f32
    %102 = vector.broadcast %cst_52 : f32 to vector<4x256xf32>
    %103 = arith.maximumf %101, %102 : vector<4x256xf32>
    %c0_53 = arith.constant 0 : index
    %c0_54 = arith.constant 0 : index
    %104 = vector.load %arg9[%c0_53, %c0_54] : memref<16x4xf32, #tpu.memory_space<vmem>>, vector<16x4xf32>
    %cst_55 = arith.constant dense<0.000000e+00> : vector<16x256xf32>
    %105 = tpu.matmul %104, %103, %cst_55 {dimension_numbers = #tpu.dot_dimension_numbers<[1], [0], [0], [1], [0, 0, 1, 1], [], []>} : vector<16x4xf32>, vector<4x256xf32>, vector<16x256xf32> -> vector<16x256xf32>
    %106 = arith.addf %105, %1 : vector<16x256xf32>
    %c0_56 = arith.constant 0 : index
    %c0_57 = arith.constant 0 : index
    %c0_58 = arith.constant 0 : index
    %107 = vector.load %arg10[%c0_56, %c0_57, %c0_58] : memref<1x16x256xf32, #tpu.memory_space<vmem>>, vector<1x16x256xf32>
    %108 = vector.shape_cast %107 : vector<1x16x256xf32> to vector<16x256xf32>
    %109 = vector.shape_cast %106 : vector<16x256xf32> to vector<1x16x256xf32>
    tpu.vector_store %arg10[%c0_56, %c0_57, %c0_58], %109 {strides = array<i32>} : memref<1x16x256xf32, #tpu.memory_space<vmem>>, vector<1x16x256xf32>,
    return
  }
  func.func @transform_0(%arg0: i32) -> (i32, i32, i32) {
    %c0_i32 = arith.constant 0 : i32
    %c0_i32_0 = arith.constant 0 : i32
    %c0_i32_1 = arith.constant 0 : i32
    return %arg0, %c0_i32, %c0_i32_0 : i32, i32, i32
  }
  func.func @transform_1(%arg0: i32) -> (i32, i32) {
    %c0_i32 = arith.constant 0 : i32
    %c0_i32_0 = arith.constant 0 : i32
    %c0_i32_1 = arith.constant 0 : i32
    return %c0_i32, %c0_i32_0 : i32, i32
  }
  func.func @transform_2(%arg0: i32) -> (i32, i32) {
    %c0_i32 = arith.constant 0 : i32
    %c0_i32_0 = arith.constant 0 : i32
    %c0_i32_1 = arith.constant 0 : i32
    return %c0_i32, %c0_i32_0 : i32, i32
  }
  func.func @transform_3(%arg0: i32) -> (i32, i32) {
    %c0_i32 = arith.constant 0 : i32
    %c0_i32_0 = arith.constant 0 : i32
    %c0_i32_1 = arith.constant 0 : i32
    return %c0_i32, %c0_i32_0 : i32, i32
  }
  func.func @transform_4(%arg0: i32) -> (i32, i32) {
    %c0_i32 = arith.constant 0 : i32
    %c0_i32_0 = arith.constant 0 : i32
    %c0_i32_1 = arith.constant 0 : i32
    return %c0_i32, %c0_i32_0 : i32, i32
  }
  func.func @transform_5(%arg0: i32) -> (i32, i32) {
    %c0_i32 = arith.constant 0 : i32
    %c0_i32_0 = arith.constant 0 : i32
    %c0_i32_1 = arith.constant 0 : i32
    return %c0_i32, %c0_i32_0 : i32, i32
  }
  func.func @transform_6(%arg0: i32) -> (i32, i32) {
    %c0_i32 = arith.constant 0 : i32
    %c0_i32_0 = arith.constant 0 : i32
    %c0_i32_1 = arith.constant 0 : i32
    return %c0_i32, %c0_i32_0 : i32, i32
  }
  func.func @transform_7(%arg0: i32) -> (i32, i32) {
    %c0_i32 = arith.constant 0 : i32
    %c0_i32_0 = arith.constant 0 : i32
    %c0_i32_1 = arith.constant 0 : i32
    return %c0_i32, %c0_i32_0 : i32, i32
  }
  func.func @transform_8(%arg0: i32) -> (i32, i32) {
    %c0_i32 = arith.constant 0 : i32
    %c0_i32_0 = arith.constant 0 : i32
    %c0_i32_1 = arith.constant 0 : i32
    return %c0_i32, %c0_i32_0 : i32, i32
  }
  func.func @transform_9(%arg0: i32) -> (i32, i32, i32) {
    %c0_i32 = arith.constant 0 : i32
    %c0_i32_0 = arith.constant 0 : i32
    %c0_i32_1 = arith.constant 0 : i32
    return %arg0, %c0_i32, %c0_i32_0 : i32, i32, i32
  }
}

</mosaic_0001>

<llo_original>
// kernel: bottleneck_v2.1
$region0: #{bottleneck_v2.1}
  #allocation0 [shape = 'u32[]', space=smem, size = 0x4, offset = 0x4, fixed_abs, tag = 'smem constant byte address 0x4 - core index']
  #allocation1 [shape = 'u32[144,128]{1,0:T(1,128)}', space=vmem, size = 0x12000, scoped, tag = 'internal scratch']
  #allocation2 [shape = 'f32[36,256]{1,0:T(8,128)}', space=vmem, size = 0xa000, scoped, tag = 'scratch operand']
  %s0 = inlined_call_operand.vmem [shape: f32[2,16,256], index: 0, kind: input, shape index: {}]
  %s1 = inlined_call_operand.vmem [shape: s32[2,256], index: 1, kind: input, shape index: {}]
  %s2 = inlined_call_operand.vmem [shape: f32[16,1], index: 2, kind: input, shape index: {}]
  %s3 = inlined_call_operand.vmem [shape: f32[16,1], index: 3, kind: input, shape index: {}]
  %s4 = inlined_call_operand.vmem [shape: f32[4,16], index: 4, kind: input, shape index: {}]
  %s5 = inlined_call_operand.vmem [shape: f32[4,1], index: 5, kind: input, shape index: {}]
  %s6 = inlined_call_operand.vmem [shape: f32[4,36], index: 6, kind: input, shape index: {}]
  %s7 = inlined_call_operand.vmem [shape: f32[4,1], index: 7, kind: input, shape index: {}]
  %s8 = inlined_call_operand.vmem [shape: f32[16,4], index: 8, kind: input, shape index: {}]
  %s9 = inlined_call_operand.vmem [shape: f32[2,16,256], index: 9, kind: output, shape index: {}]
  %s10 = sld [smem:[#allocation0]]
  $region69: #{bottleneck_v2.1} parent=0
    _
  %s12 = ssub.s32 1, %s10
  %s13 = scalar_select 0, %s12, %s10
  loop: start=0, step=1, limit=4
  $region2: #{bottleneck_v2.1} parent=0 // loop_pre_header
    _
  $region3: #{bottleneck_v2.1} parent=0 // loop_header
    %s15 = sphi 0, %s19
    %p16 = scmp.ge.s32.totalorder %s15, 4
    %s25 = sphi 0, %s27
    %s28 = sphi 0, %s25
    %s29 = sphi 0, %s28
    %s45 = sphi 0, %s29
    %s49 = sphi 0, %s49
    %s51 = sphi 0, %s49
    %s52 = sphi 0, %s51
    %s66 = sphi 0, %s52
    %s70 = sphi 0, %s70
    %s72 = sphi 0, %s70
    %s73 = sphi 0, %s72
    %s87 = sphi 0, %s73
    %s91 = sphi 0, %s91
    %s93 = sphi 0, %s91
    %s94 = sphi 0, %s93
    %s108 = sphi 0, %s94
    %s112 = sphi 0, %s112
    %s114 = sphi 0, %s112
    %s115 = sphi 0, %s114
    %s129 = sphi 0, %s115
    %s133 = sphi 0, %s133
    %s135 = sphi 0, %s133
    %s136 = sphi 0, %s135
    %s150 = sphi 0, %s136
    %s154 = sphi 0, %s154
    %s156 = sphi 0, %s154
    %s157 = sphi 0, %s156
    %s171 = sphi 0, %s157
    %s175 = sphi 0, %s175
    %s177 = sphi 0, %s175
    %s178 = sphi 0, %s177
    %s192 = sphi 0, %s178
    %s196 = sphi 0, %s196
    %s198 = sphi 0, %s196
    %s199 = sphi 0, %s198
    %s213 = sphi 0, %s199
    %s219 = sphi 0, %s221
    %s222 = sphi 0, %s219
    %s223 = sphi 0, %s222
    %s239 = sphi 0, %s223
  $region4: #{bottleneck_v2.1} parent=0 // loop_header_branch
    %18 = sbr.rel (%p16) target = $region8
  $region5: #{bottleneck_v2.1} parent=0 // loop_body
    %s20 = ssub.s32 %s15, 1
    %s21 = ssub.s32 %s15, 2
    %s22 = sadd.s32 %s15, 1
    %s23 = ssub.s32 %s15, %s22
    %p24 = scmp.eq.s32.totalorder %s23, 0
    %s26 = sadd.s32 %s25, 1
    %s27 = scalar_select %p24, %s25, %s26
    %p30 = pneg %p24
    %p31 = scmp.eq.s32.totalorder %s15, 1
    %p32 = por %p30, %p31
    %p33 = scmp.ne.s32.totalorder %s25, %s28
    %p34 = scmp.eq.s32.totalorder %s15, 0
    %p35 = por %p33, %p34
    %p36 = scmp.ne.s32.totalorder %s25, %s28
    %p37 = scmp.eq.s32.totalorder %s20, 1
    %p38 = por %p36, %p37
    %p39 = scmp.ne.s32.totalorder %s28, %s29
    %p40 = scmp.eq.s32.totalorder %s20, 0
    %p41 = por %p39, %p40
    %p42 = scmp.ne.s32.totalorder %s28, %s29
    %p43 = scmp.eq.s32.totalorder %s21, 1
    %p44 = por %p42, %p43
    %p46 = scmp.ne.s32.totalorder %s29, %s45
    %p47 = scmp.eq.s32.totalorder %s21, 0
    %p48 = por %p46, %p47
    %s50 = sadd.s32 %s49, 1
    %p53 = scmp.eq.s32.totalorder %s15, 1
    %p54 = scmp.ne.s32.totalorder %s49, %s51
    %p55 = scmp.eq.s32.totalorder %s15, 0
    %p56 = por %p54, %p55
    %p57 = scmp.ne.s32.totalorder %s49, %s51
    %p58 = scmp.eq.s32.totalorder %s20, 1
    %p59 = por %p57, %p58
    %p60 = scmp.ne.s32.totalorder %s51, %s52
    %p61 = scmp.eq.s32.totalorder %s20, 0
    %p62 = por %p60, %p61
    %p63 = scmp.ne.s32.totalorder %s51, %s52
    %p64 = scmp.eq.s32.totalorder %s21, 1
    %p65 = por %p63, %p64
    %p67 = scmp.ne.s32.totalorder %s52, %s66
    %p68 = scmp.eq.s32.totalorder %s21, 0
    %p69 = por %p67, %p68
    %s71 = sadd.s32 %s70, 1
    %p74 = scmp.eq.s32.totalorder %s15, 1
    %p75 = scmp.ne.s32.totalorder %s70, %s72
    %p76 = scmp.eq.s32.totalorder %s15, 0
    %p77 = por %p75, %p76
    %p78 = scmp.ne.s32.totalorder %s70, %s72
    %p79 = scmp.eq.s32.totalorder %s20, 1
    %p80 = por %p78, %p79
    %p81 = scmp.ne.s32.totalorder %s72, %s73
    %p82 = scmp.eq.s32.totalorder %s20, 0
    %p83 = por %p81, %p82
    %p84 = scmp.ne.s32.totalorder %s72, %s73
    %p85 = scmp.eq.s32.totalorder %s21, 1
    %p86 = por %p84, %p85
    %p88 = scmp.ne.s32.totalorder %s73, %s87
    %p89 = scmp.eq.s32.totalorder %s21, 0
    %p90 = por %p88, %p89
    %s92 = sadd.s32 %s91, 1
    %p95 = scmp.eq.s32.totalorder %s15, 1
    %p96 = scmp.ne.s32.totalorder %s91, %s93
    %p97 = scmp.eq.s32.totalorder %s15, 0
    %p98 = por %p96, %p97
    %p99 = scmp.ne.s32.totalorder %s91, %s93
    %p100 = scmp.eq.s32.totalorder %s20, 1
    %p101 = por %p99, %p100
    %p102 = scmp.ne.s32.totalorder %s93, %s94
    %p103 = scmp.eq.s32.totalorder %s20, 0
    %p104 = por %p102, %p103
    %p105 = scmp.ne.s32.totalorder %s93, %s94
    %p106 = scmp.eq.s32.totalorder %s21, 1
    %p107 = por %p105, %p106
    %p109 = scmp.ne.s32.totalorder %s94, %s108
    %p110 = scmp.eq.s32.totalorder %s21, 0
    %p111 = por %p109, %p110
    %s113 = sadd.s32 %s112, 1
    %p116 = scmp.eq.s32.totalorder %s15, 1
    %p117 = scmp.ne.s32.totalorder %s112, %s114
    %p118 = scmp.eq.s32.totalorder %s15, 0
    %p119 = por %p117, %p118
    %p120 = scmp.ne.s32.totalorder %s112, %s114
    %p121 = scmp.eq.s32.totalorder %s20, 1
    %p122 = por %p120, %p121
    %p123 = scmp.ne.s32.totalorder %s114, %s115
    %p124 = scmp.eq.s32.totalorder %s20, 0
    %p125 = por %p123, %p124
    %p126 = scmp.ne.s32.totalorder %s114, %s115
    %p127 = scmp.eq.s32.totalorder %s21, 1
    %p128 = por %p126, %p127
    %p130 = scmp.ne.s32.totalorder %s115, %s129
    %p131 = scmp.eq.s32.totalorder %s21, 0
    %p132 = por %p130, %p131
    %s134 = sadd.s32 %s133, 1
    %p137 = scmp.eq.s32.totalorder %s15, 1
    %p138 = scmp.ne.s32.totalorder %s133, %s135
    %p139 = scmp.eq.s32.totalorder %s15, 0
    %p140 = por %p138, %p139
    %p141 = scmp.ne.s32.totalorder %s133, %s135
    %p142 = scmp.eq.s32.totalorder %s20, 1
    %p143 = por %p141, %p142
    %p144 = scmp.ne.s32.totalorder %s135, %s136
    %p145 = scmp.eq.s32.totalorder %s20, 0
    %p146 = por %p144, %p145
    %p147 = scmp.ne.s32.totalorder %s135, %s136
    %p148 = scmp.eq.s32.totalorder %s21, 1
    %p149 = por %p147, %p148
    %p151 = scmp.ne.s32.totalorder %s136, %s150
    %p152 = scmp.eq.s32.totalorder %s21, 0
    %p153 = por %p151, %p152
    %s155 = sadd.s32 %s154, 1
    %p158 = scmp.eq.s32.totalorder %s15, 1
    %p159 = scmp.ne.s32.totalorder %s154, %s156
    %p160 = scmp.eq.s32.totalorder %s15, 0
    %p161 = por %p159, %p160
    %p162 = scmp.ne.s32.totalorder %s154, %s156
    %p163 = scmp.eq.s32.totalorder %s20, 1
    %p164 = por %p162, %p163
    %p165 = scmp.ne.s32.totalorder %s156, %s157
    %p166 = scmp.eq.s32.totalorder %s20, 0
    %p167 = por %p165, %p166
    %p168 = scmp.ne.s32.totalorder %s156, %s157
    %p169 = scmp.eq.s32.totalorder %s21, 1
    %p170 = por %p168, %p169
    %p172 = scmp.ne.s32.totalorder %s157, %s171
    %p173 = scmp.eq.s32.totalorder %s21, 0
    %p174 = por %p172, %p173
    %s176 = sadd.s32 %s175, 1
    %p179 = scmp.eq.s32.totalorder %s15, 1
    %p180 = scmp.ne.s32.totalorder %s175, %s177
    %p181 = scmp.eq.s32.totalorder %s15, 0
    %p182 = por %p180, %p181
    %p183 = scmp.ne.s32.totalorder %s175, %s177
    %p184 = scmp.eq.s32.totalorder %s20, 1
    %p185 = por %p183, %p184
    %p186 = scmp.ne.s32.totalorder %s177, %s178
    %p187 = scmp.eq.s32.totalorder %s20, 0
    %p188 = por %p186, %p187
    %p189 = scmp.ne.s32.totalorder %s177, %s178
    %p190 = scmp.eq.s32.totalorder %s21, 1
    %p191 = por %p189, %p190
    %p193 = scmp.ne.s32.totalorder %s178, %s192
    %p194 = scmp.eq.s32.totalorder %s21, 0
    %p195 = por %p193, %p194
    %s197 = sadd.s32 %s196, 1
    %p200 = scmp.eq.s32.totalorder %s15, 1
    %p201 = scmp.ne.s32.totalorder %s196, %s198
    %p202 = scmp.eq.s32.totalorder %s15, 0
    %p203 = por %p201, %p202
    %p204 = scmp.ne.s32.totalorder %s196, %s198
    %p205 = scmp.eq.s32.totalorder %s20, 1
    %p206 = por %p204, %p205
    %p207 = scmp.ne.s32.totalorder %s198, %s199
    %p208 = scmp.eq.s32.totalorder %s20, 0
    %p209 = por %p207, %p208
    %p210 = scmp.ne.s32.totalorder %s198, %s199
    %p211 = scmp.eq.s32.totalorder %s21, 1
    %p212 = por %p210, %p211
    %p214 = scmp.ne.s32.totalorder %s199, %s213
    %p215 = scmp.eq.s32.totalorder %s21, 0
    %p216 = por %p214, %p215
    %s217 = ssub.s32 %s15, %s22
    %p218 = scmp.eq.s32.totalorder %s217, 0
    %s220 = sadd.s32 %s219, 1
    %s221 = scalar_select %p218, %s219, %s220
    %p224 = pneg %p218
    %p225 = scmp.eq.s32.totalorder %s15, 1
    %p226 = por %p224, %p225
    %p227 = scmp.ne.s32.totalorder %s219, %s222
    %p228 = scmp.eq.s32.totalorder %s15, 0
    %p229 = por %p227, %p228
    %p230 = scmp.ne.s32.totalorder %s219, %s222
    %p231 = scmp.eq.s32.totalorder %s20, 1
    %p232 = por %p230, %p231
    %p233 = scmp.ne.s32.totalorder %s222, %s223
    %p234 = scmp.eq.s32.totalorder %s20, 0
    %p235 = por %p233, %p234
    %p236 = scmp.ne.s32.totalorder %s222, %s223
    %p237 = scmp.eq.s32.totalorder %s21, 1
    %p238 = por %p236, %p237
    %p240 = scmp.ne.s32.totalorder %s223, %s239
    %p241 = scmp.eq.s32.totalorder %s21, 0
    %p242 = por %p240, %p241
    %p243 = scmp.le.s32.totalorder 1, %s15
    %p244 = scmp.lt.s32.totalorder %s15, 3
    %p245 = pnand %p243, %p244
    %p246 = pneg %p245
    // Predicated region
    $region9: #{bottleneck_v2.1} parent=5 // pred_check
      _
    $region10: #{bottleneck_v2.1} parent=5 // pred_check_branch
      %248 = sbr.rel (%p245) target = $region12
    $region11: #{bottleneck_v2.1} parent=5 // pred_region
      %s249 = ssub.s32 %s15, 1
      // Predicated region
      $region13: #{bottleneck_v2.1} parent=11 // pred_check
        %p250 = pneg %p62
      $region14: #{bottleneck_v2.1} parent=11 // pred_check_branch
        %252 = sbr.rel (%p250) target = $region16
      $region15: #{bottleneck_v2.1} parent=11 // pred_region
        _
      $region16: #{bottleneck_v2.1} parent=11 // pred_fallthru
        _
      // Predicated region
      $region17: #{bottleneck_v2.1} parent=11 // pred_check
        %p253 = pneg %p83
      $region18: #{bottleneck_v2.1} parent=11 // pred_check_branch
        %255 = sbr.rel (%p253) target = $region20
      $region19: #{bottleneck_v2.1} parent=11 // pred_region
        _
      $region20: #{bottleneck_v2.1} parent=11 // pred_fallthru
        _
      // Predicated region
      $region21: #{bottleneck_v2.1} parent=11 // pred_check
        %p256 = pneg %p104
      $region22: #{bottleneck_v2.1} parent=11 // pred_check_branch
        %258 = sbr.rel (%p256) target = $region24
      $region23: #{bottleneck_v2.1} parent=11 // pred_region
        _
      $region24: #{bottleneck_v2.1} parent=11 // pred_fallthru
        _
      // Predicated region
      $region25: #{bottleneck_v2.1} parent=11 // pred_check
        %p259 = pneg %p125
      $region26: #{bottleneck_v2.1} parent=11 // pred_check_branch
        %261 = sbr.rel (%p259) target = $region28
      $region27: #{bottleneck_v2.1} parent=11 // pred_region
        _
      $region28: #{bottleneck_v2.1} parent=11 // pred_fallthru
        _
      // Predicated region
      $region29: #{bottleneck_v2.1} parent=11 // pred_check
        %p262 = pneg %p146
      $region30: #{bottleneck_v2.1} parent=11 // pred_check_branch
        %264 = sbr.rel (%p262) target = $region32
      $region31: #{bottleneck_v2.1} parent=11 // pred_region
        _
      $region32: #{bottleneck_v2.1} parent=11 // pred_fallthru
        _
      // Predicated region
      $region33: #{bottleneck_v2.1} parent=11 // pred_check
        %p265 = pneg %p167
      $region34: #{bottleneck_v2.1} parent=11 // pred_check_branch
        %267 = sbr.rel (%p265) target = $region36
      $region35: #{bottleneck_v2.1} parent=11 // pred_region
        _
      $region36: #{bottleneck_v2.1} parent=11 // pred_fallthru
        _
      // Predicated region
      $region37: #{bottleneck_v2.1} parent=11 // pred_check
        %p268 = pneg %p188
      $region38: #{bottleneck_v2.1} parent=11 // pred_check_branch
        %270 = sbr.rel (%p268) target = $region40
      $region39: #{bottleneck_v2.1} parent=11 // pred_region
        _
      $region40: #{bottleneck_v2.1} parent=11 // pred_fallthru
        _
      // Predicated region
      $region41: #{bottleneck_v2.1} parent=11 // pred_check
        %p271 = pneg %p209
      $region42: #{bottleneck_v2.1} parent=11 // pred_check_branch
        %273 = sbr.rel (%p271) target = $region44
      $region43: #{bottleneck_v2.1} parent=11 // pred_region
        _
      $region44: #{bottleneck_v2.1} parent=11 // pred_fallthru
        _
    $region12: #{bottleneck_v2.1} parent=5 // pred_fallthru
      _
    %p274 = scmp.lt.s32.totalorder %s15, 2
    // Predicated region
    $region45: #{bottleneck_v2.1} parent=5 // pred_check
      %p275 = pneg %p274
    $region46: #{bottleneck_v2.1} parent=5 // pred_check_branch
      %277 = sbr.rel (%p275) target = $region48
    $region47: #{bottleneck_v2.1} parent=5 // pred_region
      // Predicated region
      $region49: #{bottleneck_v2.1} parent=47 // pred_check
        %p278 = pneg %p35
      $region50: #{bottleneck_v2.1} parent=47 // pred_check_branch
        %280 = sbr.rel (%p278) target = $region52
      $region51: #{bottleneck_v2.1} parent=47 // pred_region
        %p281 = scmp.lt.s32.totalorder %s15, 1
        %s282 = scalar_select %p281, %s15, 1
        %s283 = smul.addr %s282, 4
        %s284 = smul.addr %s283, 8
        %s285 = scalar_lea.vmem %s0, %s284
      $region52: #{bottleneck_v2.1} parent=47 // pred_fallthru
        _
    $region48: #{bottleneck_v2.1} parent=5 // pred_fallthru
      _
    %p286 = scmp.le.s32.totalorder 1, %s15
    %p287 = scmp.lt.s32.totalorder %s15, 3
    %p288 = pnand %p286, %p287
    %p289 = pneg %p288
    // Predicated region
    $region53: #{bottleneck_v2.1} parent=5 // pred_check
      _
    $region54: #{bottleneck_v2.1} parent=5 // pred_check_branch
      %291 = sbr.rel (%p288) target = $region56
    $region55: #{bottleneck_v2.1} parent=5 // pred_region
      %s292 = ssub.s32 %s15, 1
      %p293 = scmp.lt.s32.totalorder %s20, 1
      %s294 = scalar_select %p293, %s20, 1
      %s295 = smul.addr %s294, 4
      %s296 = smul.addr %s295, 8
      %s297 = scalar_lea.vmem %s0, %s296
      %p298 = pneg %p41
      %p299 = pneg %p38
      %p300 = pneg %p62
      %p301 = pneg %p59
      %p302 = pneg %p83
      %p303 = pneg %p80
      %p304 = pneg %p104
      %p305 = pneg %p101
      %p306 = pneg %p125
      %p307 = pneg %p122
      %p308 = pneg %p146
      %p309 = pneg %p143
      %p310 = pneg %p167
      %p311 = pneg %p164
      %p312 = pneg %p188
      %p313 = pneg %p185
      %p314 = pneg %p209
      %p315 = pneg %p206
      %p316 = pneg %p235
      %p317 = pneg %p232
      %p318 = scmp.lt.s32.totalorder %s20, 1
      %s319 = scalar_select %p318, %s20, 1
      %s320 = smul.addr %s319, 4
      %s321 = smul.addr %s320, 8
      %s322 = scalar_lea.vmem %s9, %s321
      %p323 = scmp.lt.s32.totalorder %s20, 1
      %s324 = scalar_select %p323, %s20, 1
      %s325 = smul.addr %s324, 4
      %s326 = smul.addr %s325, 8
      %s327 = scalar_lea.vmem %s0, %s326
      %p328 = scmp.lt.s32.totalorder %s20, 1
      %s329 = scalar_select %p328, %s20, 1
      %s330 = smul.addr %s329, 4
      %s331 = smul.addr %s330, 8
      %s332 = scalar_lea.vmem %s9, %s331
      %v333 = vld [vmem:[%s327] sm:$0xff]
      %v334 = vld [vmem:[%s327 + $0x8] sm:$0xff]
      %v335 = vld [vmem:[%s327 + $0x10] sm:$0xff]
      %v336 = vld [vmem:[%s327 + $0x18] sm:$0xff]
      %v337 = vld [vmem:[%s2] sm:$0xff]
      %v338 = vld [vmem:[%s2 + $0x8] sm:$0xff]
      %340 = vset.pattern.permute.xlu0 0
      %341 = vperm.xlu0 %340, %v337
      %v342 = vpop.permute.xlu0 %341
      %345 = vset.pattern.permute.xlu0 0
      %346 = vperm.xlu0 %345, %v338
      %v347 = vpop.permute.xlu0 %346
      %v349 = vmul.f32 %v333, %v342
      %v350 = vmul.f32 %v334, %v342
      %v351 = vmul.f32 %v335, %v347
      %v352 = vmul.f32 %v336, %v347
      %v353 = vld [vmem:[%s3] sm:$0xff]
      %v354 = vld [vmem:[%s3 + $0x8] sm:$0xff]
      %356 = vset.pattern.permute.xlu0 0
      %357 = vperm.xlu0 %356, %v353
      %v358 = vpop.permute.xlu0 %357
      %361 = vset.pattern.permute.xlu0 0
      %362 = vperm.xlu0 %361, %v354
      %v363 = vpop.permute.xlu0 %362
      %v365 = vadd.f32 %v349, %v358
      %v366 = vadd.f32 %v350, %v358
      %v367 = vadd.f32 %v351, %v363
      %v368 = vadd.f32 %v352, %v363
      %v369 = vmax.f32 %v365, 0.0
      %v370 = vmax.f32 %v366, 0.0
      %v371 = vmax.f32 %v367, 0.0
      %v372 = vmax.f32 %v368, 0.0
      %v373 = vld [vmem:[%s4] sm:$0xf]
      %v374 = vld [vmem:[%s5] sm:$0xf]
      %376 = vset.pattern.permute.xlu0 0
      %377 = vperm.xlu0 %376, %v374
      %v378 = vpop.permute.xlu0 %377
      %vm380 = vcmask 130048
      %v382 = vsel %vm380, %v373, 0
      %384 = vmatprep.subr.mxu0 0.0
      %385 = vmatpush1.msra.mxu0 0.0
      %386 = vmatprep.subr.mxu0 0.0
      %387 = vmatpush1.msra.mxu0 0.0
      %388 = vmatprep.subr.mxu0 0.0
      %389 = vmatpush1.msra.mxu0 0.0
      %390 = vmatprep.subr.mxu0 0.0
      %391 = vmatpush1.msra.mxu0 0.0
      %392 = vmatprep.subr.mxu0 0.0
      %393 = vmatpush1.msra.mxu0 0.0
      %394 = vmatprep.subr.mxu0 0.0
      %395 = vmatpush1.msra.mxu0 0.0
      %396 = vmatprep.subr.mxu0 0.0
      %397 = vmatpush1.msra.mxu0 0.0
      %398 = vmatprep.subr.mxu0 0.0
      %399 = vmatpush1.msra.mxu0 0.0
      %400 = vmatprep.subr.mxu0 0.0
      %401 = vmatpush1.msra.mxu0 0.0
      %402 = vmatprep.subr.mxu0 0.0
      %403 = vmatpush1.msra.mxu0 0.0
      %404 = vmatprep.subr.mxu0 0.0
      %405 = vmatpush1.msra.mxu0 0.0
      %406 = vmatprep.subr.mxu0 0.0
      %407 = vmatpush1.msra.mxu0 0.0
      %408 = vmatprep.subr.mxu0 0.0
      %409 = vmatpush1.msra.mxu0 0.0
      %410 = vmatprep.subr.mxu0 0.0
      %411 = vmatpush1.msra.mxu0 0.0
      %412 = vmatprep.subr.mxu0 %v372
      %413 = vmatpush1.msra.mxu0 %v371
      %414 = vmatprep.subr.mxu0 %v370
      %415 = vmatpush1.msra.mxu0 %v369
      %416 = vmatprep.subr.mxu0 0.0
      %417 = vmatpush2.msra.mxu0 0.0
      %418 = vmatprep.subr.mxu0 0.0
      %419 = vmatpush2.msra.mxu0 0.0
      %420 = vmatprep.subr.mxu0 0.0
      %421 = vmatpush2.msra.mxu0 0.0
      %422 = vmatprep.subr.mxu0 0.0
      %423 = vmatpush2.msra.mxu0 0.0
      %424 = vmatprep.subr.mxu0 0.0
      %425 = vmatpush2.msra.mxu0 0.0
      %426 = vmatprep.subr.mxu0 0.0
      %427 = vmatpush2.msra.mxu0 0.0
      %428 = vmatprep.subr.mxu0 0.0
      %429 = vmatpush2.msra.mxu0 0.0
      %430 = vmatprep.subr.mxu0 0.0
      %431 = vmatpush2.msra.mxu0 0.0
      %432 = vmatprep.subr.mxu0 0.0
      %433 = vmatpush2.msra.mxu0 0.0
      %434 = vmatprep.subr.mxu0 0.0
      %435 = vmatpush2.msra.mxu0 0.0
      %436 = vmatprep.subr.mxu0 0.0
      %437 = vmatpush2.msra.mxu0 0.0
      %438 = vmatprep.subr.mxu0 0.0
      %439 = vmatpush2.msra.mxu0 0.0
      %440 = vmatprep.subr.mxu0 0.0
      %441 = vmatpush2.msra.mxu0 0.0
      %442 = vmatprep.subr.mxu0 0.0
      %443 = vmatpush2.msra.mxu0 0.0
      %444 = vmatprep.subr.mxu0 0.0
      %445 = vmatpush2.msra.mxu0 0.0
      %446 = vmatprep.subr.mxu0 0.0
      %447 = vmatpush2.msra.mxu0 0.0
      %448 = vmatprep.mubr.f32.mxu0 0.0
      %449 = vmatmul.mubr.f32.gmra.mxu0 %v382
      %v450 = vpop.f32.mrf.mxu0
      %v451 = vadd.f32 %v378, %v450
      %v452 = vpop.f32.mrf.mxu0
      %v453 = vadd.f32 %v378, %v452
      %454 = vdwg.mxu0
      %v455 = vmax.f32 %v451, 0.0
      %v456 = vmax.f32 %v453, 0.0
      %v457 = vld [vmem:[%s1] ss:$2 sm:$0x3]
      %s458 = scalar_lea.vmem %s1, 1
      %v459 = vld [vmem:[%s458] ss:$2 sm:$0x3]
      %460 = vrot.lane.b32.xlu0 %v455, 17
      %v461 = vpop.permute.xlu0 %460
      %462 = vrot.lane.b32.xlu0 %v456, 17
      %v463 = vpop.permute.xlu0 %462
      %v464 = vlaneseq
      %v465 = vand.u32 %v464, 127
      %vm466 = vcmp.lt.s32.totalorder %v465, 17
      %v467 = vsel %vm466, %v461, %v463
      %v468 = vsel %vm466, %v463, %v461
      %vm469 = vcmp.ge.s32.totalorder %v457, 1
      %vm470 = vcmp.ge.s32.totalorder %v459, 1
      %vm471 = vmand %vm469, %vm470
      %v472 = vsel %vm471, 1, 0
      %v473 = vlaneseq
      %v474 = vshrl.u32 %v473, 7
      %v475 = vsub.s32 0, %v474
      %v476 = vrot.slane %v472, %v475
      %v477 = vlaneseq
      %v478 = vshrl.u32 %v477, 7
      %v479 = vsub.s32 1, %v478
      %v480 = vrot.slane %v472, %v479
      %vm481 = vcmp.eq.s32.totalorder %v476, 1
      %vm482 = vcmp.eq.s32.totalorder %v480, 1
      %v483 = vsel %vm481, %v468, 0.0
      %v484 = vsel %vm482, %v467, 0.0
      %485 = vst [vmem:[#allocation2] sm:$0xf] %v483
      %486 = vst [vmem:[#allocation2 + $0x8] sm:$0xf] %v484
      %487 = vrot.lane.b32.xlu0 %v455, 16
      %v488 = vpop.permute.xlu0 %487
      %489 = vrot.lane.b32.xlu0 %v456, 16
      %v490 = vpop.permute.xlu0 %489
      %vm491 = vcmp.lt.s32.totalorder %v465, 16
      %v492 = vsel %vm491, %v488, %v490
      %v493 = vsel %vm491, %v490, %v488
      %v494 = vsel %vm469, 1, 0
      %v495 = vlaneseq
      %v496 = vshrl.u32 %v495, 7
      %v497 = vsub.s32 0, %v496
      %v498 = vrot.slane %v494, %v497
      %v499 = vlaneseq
      %v500 = vshrl.u32 %v499, 7
      %v501 = vsub.s32 1, %v500
      %v502 = vrot.slane %v494, %v501
      %vm503 = vcmp.eq.s32.totalorder %v498, 1
      %vm504 = vcmp.eq.s32.totalorder %v502, 1
      %v505 = vsel %vm503, %v493, 0.0
      %v506 = vsel %vm504, %v492, 0.0
      %v509 = vrot.slane %v505, 4
      %v510 = vrot.slane %v506, 4
      %513 = vst [vmem:[#allocation2] sm:$0xf0] %v509
      %514 = vst [vmem:[#allocation2 + $0x8] sm:$0xf0] %v510
      %515 = vrot.lane.b32.xlu0 %v455, 15
      %v516 = vpop.permute.xlu0 %515
      %517 = vrot.lane.b32.xlu0 %v456, 15
      %v518 = vpop.permute.xlu0 %517
      %vm519 = vcmp.lt.s32.totalorder %v465, 15
      %v520 = vsel %vm519, %v516, %v518
      %v521 = vsel %vm519, %v518, %v516
      %vm522 = vcmp.lt.s32.totalorder %v459, 15
      %vm523 = vmand %vm469, %vm522
      %v524 = vsel %vm523, 1, 0
      %v525 = vlaneseq
      %v526 = vshrl.u32 %v525, 7
      %v527 = vsub.s32 0, %v526
      %v528 = vrot.slane %v524, %v527
      %v529 = vlaneseq
      %v530 = vshrl.u32 %v529, 7
      %v531 = vsub.s32 1, %v530
      %v532 = vrot.slane %v524, %v531
      %vm533 = vcmp.eq.s32.totalorder %v528, 1
      %vm534 = vcmp.eq.s32.totalorder %v532, 1
      %v535 = vsel %vm533, %v521, 0.0
      %v536 = vsel %vm534, %v520, 0.0
      %537 = vst [vmem:[#allocation2 + $0x10] sm:$0xf] %v535
      %538 = vst [vmem:[#allocation2 + $0x18] sm:$0xf] %v536
      %539 = vrot.lane.b32.xlu0 %v455, 1
      %v540 = vpop.permute.xlu0 %539
      %541 = vrot.lane.b32.xlu0 %v456, 1
      %v542 = vpop.permute.xlu0 %541
      %vm543 = vcmp.lt.s32.totalorder %v465, 1
      %v544 = vsel %vm543, %v540, %v542
      %v545 = vsel %vm543, %v542, %v540
      %v546 = vsel %vm470, 1, 0
      %v547 = vlaneseq
      %v548 = vshrl.u32 %v547, 7
      %v549 = vsub.s32 0, %v548
      %v550 = vrot.slane %v546, %v549
      %v551 = vlaneseq
      %v552 = vshrl.u32 %v551, 7
      %v553 = vsub.s32 1, %v552
      %v554 = vrot.slane %v546, %v553
      %vm555 = vcmp.eq.s32.totalorder %v550, 1
      %vm556 = vcmp.eq.s32.totalorder %v554, 1
      %v557 = vsel %vm555, %v545, 0.0
      %v558 = vsel %vm556, %v544, 0.0
      %v561 = vrot.slane %v557, 4
      %v562 = vrot.slane %v558, 4
      %565 = vst [vmem:[#allocation2 + $0x10] sm:$0xf0] %v561
      %566 = vst [vmem:[#allocation2 + $0x18] sm:$0xf0] %v562
      %567 = vst [vmem:[#allocation2 + $0x20] sm:$0xf] %v455
      %568 = vst [vmem:[#allocation2 + $0x28] sm:$0xf] %v456
      %569 = vrot.lane.b32.xlu0 %v455, 127
      %v570 = vpop.permute.xlu0 %569
      %571 = vrot.lane.b32.xlu0 %v456, 127
      %v572 = vpop.permute.xlu0 %571
      %vm573 = vcmp.lt.s32.totalorder %v465, 127
      %v574 = vsel %vm573, %v570, %v572
      %v575 = vsel %vm573, %v572, %v570
      %v576 = vsel %vm522, 1, 0
      %v577 = vlaneseq
      %v578 = vshrl.u32 %v577, 7
      %v579 = vsub.s32 0, %v578
      %v580 = vrot.slane %v576, %v579
      %v581 = vlaneseq
      %v582 = vshrl.u32 %v581, 7
      %v583 = vsub.s32 1, %v582
      %v584 = vrot.slane %v576, %v583
      %vm585 = vcmp.eq.s32.totalorder %v580, 1
      %vm586 = vcmp.eq.s32.totalorder %v584, 1
      %v587 = vsel %vm585, %v574, 0.0
      %v588 = vsel %vm586, %v575, 0.0
      %v591 = vrot.slane %v587, 4
      %v592 = vrot.slane %v588, 4
      %595 = vst [vmem:[#allocation2 + $0x20] sm:$0xf0] %v591
      %596 = vst [vmem:[#allocation2 + $0x28] sm:$0xf0] %v592
      %597 = vrot.lane.b32.xlu0 %v455, 113
      %v598 = vpop.permute.xlu0 %597
      %599 = vrot.lane.b32.xlu0 %v456, 113
      %v600 = vpop.permute.xlu0 %599
      %vm601 = vcmp.lt.s32.totalorder %v465, 113
      %v602 = vsel %vm601, %v598, %v600
      %v603 = vsel %vm601, %v600, %v598
      %vm604 = vcmp.lt.s32.totalorder %v457, 15
      %vm605 = vmand %vm604, %vm470
      %v606 = vsel %vm605, 1, 0
      %v607 = vlaneseq
      %v608 = vshrl.u32 %v607, 7
      %v609 = vsub.s32 0, %v608
      %v610 = vrot.slane %v606, %v609
      %v611 = vlaneseq
      %v612 = vshrl.u32 %v611, 7
      %v613 = vsub.s32 1, %v612
      %v614 = vrot.slane %v606, %v613
      %vm615 = vcmp.eq.s32.totalorder %v610, 1
      %vm616 = vcmp.eq.s32.totalorder %v614, 1
      %v617 = vsel %vm615, %v602, 0.0
      %v618 = vsel %vm616, %v603, 0.0
      %619 = vst [vmem:[#allocation2 + $0x30] sm:$0xf] %v617
      %620 = vst [vmem:[#allocation2 + $0x38] sm:$0xf] %v618
      %621 = vrot.lane.b32.xlu0 %v455, 112
      %v622 = vpop.permute.xlu0 %621
      %623 = vrot.lane.b32.xlu0 %v456, 112
      %v624 = vpop.permute.xlu0 %623
      %vm625 = vcmp.lt.s32.totalorder %v465, 112
      %v626 = vsel %vm625, %v622, %v624
      %v627 = vsel %vm625, %v624, %v622
      %v628 = vsel %vm604, 1, 0
      %v629 = vlaneseq
      %v630 = vshrl.u32 %v629, 7
      %v631 = vsub.s32 0, %v630
      %v632 = vrot.slane %v628, %v631
      %v633 = vlaneseq
      %v634 = vshrl.u32 %v633, 7
      %v635 = vsub.s32 1, %v634
      %v636 = vrot.slane %v628, %v635
      %vm637 = vcmp.eq.s32.totalorder %v632, 1
      %vm638 = vcmp.eq.s32.totalorder %v636, 1
      %v639 = vsel %vm637, %v626, 0.0
      %v640 = vsel %vm638, %v627, 0.0
      %v643 = vrot.slane %v639, 4
      %v644 = vrot.slane %v640, 4
      %647 = vst [vmem:[#allocation2 + $0x30] sm:$0xf0] %v643
      %648 = vst [vmem:[#allocation2 + $0x38] sm:$0xf0] %v644
      %649 = vrot.lane.b32.xlu0 %v455, 111
      %v650 = vpop.permute.xlu0 %649
      %651 = vrot.lane.b32.xlu0 %v456, 111
      %v652 = vpop.permute.xlu0 %651
      %vm653 = vcmp.lt.s32.totalorder %v465, 111
      %v654 = vsel %vm653, %v650, %v652
      %v655 = vsel %vm653, %v652, %v650
      %vm656 = vmand %vm604, %vm522
      %v657 = vsel %vm656, 1, 0
      %v658 = vlaneseq
      %v659 = vshrl.u32 %v658, 7
      %v660 = vsub.s32 0, %v659
      %v661 = vrot.slane %v657, %v660
      %v662 = vlaneseq
      %v663 = vshrl.u32 %v662, 7
      %v664 = vsub.s32 1, %v663
      %v665 = vrot.slane %v657, %v664
      %vm666 = vcmp.eq.s32.totalorder %v661, 1
      %vm667 = vcmp.eq.s32.totalorder %v665, 1
      %v668 = vsel %vm666, %v654, 0.0
      %v669 = vsel %vm667, %v655, 0.0
      %670 = vst [vmem:[#allocation2 + $0x40] sm:$0xf] %v668
      %671 = vst [vmem:[#allocation2 + $0x48] sm:$0xf] %v669
      %v672 = vld [vmem:[%s6] sm:$0xf]
      %v673 = vld [vmem:[#allocation2] sm:$0xff]
      %v674 = vld [vmem:[#allocation2 + $0x8] sm:$0xff]
      %v675 = vld [vmem:[#allocation2 + $0x10] sm:$0xff]
      %v676 = vld [vmem:[#allocation2 + $0x18] sm:$0xff]
      %v677 = vld [vmem:[#allocation2 + $0x20] sm:$0xff]
      %v678 = vld [vmem:[#allocation2 + $0x28] sm:$0xff]
      %v679 = vld [vmem:[#allocation2 + $0x30] sm:$0xff]
      %v680 = vld [vmem:[#allocation2 + $0x38] sm:$0xff]
      %v681 = vld [vmem:[#allocation2 + $0x40] sm:$0xf]
      %v682 = vld [vmem:[#allocation2 + $0x48] sm:$0xf]
      %v683 = vld [vmem:[%s7] sm:$0xf]
      %685 = vset.pattern.permute.xlu0 0
      %686 = vperm.xlu0 %685, %v683
      %v687 = vpop.permute.xlu0 %686
      %vm689 = vcmask 293888
      %v691 = vsel %vm689, %v672, 0
      %vm693 = vcmask 1043456
      %v695 = vsel %vm693, %v681, 0
      %v698 = vsel %vm693, %v682, 0
      %700 = vmatprep.subr.mxu0 0.0
      %701 = vmatpush1.msra.mxu0 0.0
      %702 = vmatprep.subr.mxu0 0.0
      %703 = vmatpush1.msra.mxu0 0.0
      %704 = vmatprep.subr.mxu0 0.0
      %705 = vmatpush1.msra.mxu0 0.0
      %706 = vmatprep.subr.mxu0 0.0
      %707 = vmatpush1.msra.mxu0 0.0
      %708 = vmatprep.subr.mxu0 0.0
      %709 = vmatpush1.msra.mxu0 0.0
      %710 = vmatprep.subr.mxu0 0.0
      %711 = vmatpush1.msra.mxu0 0.0
      %712 = vmatprep.subr.mxu0 0.0
      %713 = vmatpush1.msra.mxu0 0.0
      %714 = vmatprep.subr.mxu0 0.0
      %715 = vmatpush1.msra.mxu0 0.0
      %716 = vmatprep.subr.mxu0 0.0
      %717 = vmatpush1.msra.mxu0 0.0
      %718 = vmatprep.subr.mxu0 0.0
      %719 = vmatpush1.msra.mxu0 0.0
      %720 = vmatprep.subr.mxu0 0.0
      %721 = vmatpush1.msra.mxu0 0.0
      %722 = vmatprep.subr.mxu0 %v698
      %723 = vmatpush1.msra.mxu0 %v695
      %724 = vmatprep.subr.mxu0 %v680
      %725 = vmatpush1.msra.mxu0 %v679
      %726 = vmatprep.subr.mxu0 %v678
      %727 = vmatpush1.msra.mxu0 %v677
      %728 = vmatprep.subr.mxu0 %v676
      %729 = vmatpush1.msra.mxu0 %v675
      %730 = vmatprep.subr.mxu0 %v674
      %731 = vmatpush1.msra.mxu0 %v673
      %732 = vmatprep.subr.mxu0 0.0
      %733 = vmatpush2.msra.mxu0 0.0
      %734 = vmatprep.subr.mxu0 0.0
      %735 = vmatpush2.msra.mxu0 0.0
      %736 = vmatprep.subr.mxu0 0.0
      %737 = vmatpush2.msra.mxu0 0.0
      %738 = vmatprep.subr.mxu0 0.0
      %739 = vmatpush2.msra.mxu0 0.0
      %740 = vmatprep.subr.mxu0 0.0
      %741 = vmatpush2.msra.mxu0 0.0
      %742 = vmatprep.subr.mxu0 0.0
      %743 = vmatpush2.msra.mxu0 0.0
      %744 = vmatprep.subr.mxu0 0.0
      %745 = vmatpush2.msra.mxu0 0.0
      %746 = vmatprep.subr.mxu0 0.0
      %747 = vmatpush2.msra.mxu0 0.0
      %748 = vmatprep.subr.mxu0 0.0
      %749 = vmatpush2.msra.mxu0 0.0
      %750 = vmatprep.subr.mxu0 0.0
      %751 = vmatpush2.msra.mxu0 0.0
      %752 = vmatprep.subr.mxu0 0.0
      %753 = vmatpush2.msra.mxu0 0.0
      %754 = vmatprep.subr.mxu0 0.0
      %755 = vmatpush2.msra.mxu0 0.0
      %756 = vmatprep.subr.mxu0 0.0
      %757 = vmatpush2.msra.mxu0 0.0
      %758 = vmatprep.subr.mxu0 0.0
      %759 = vmatpush2.msra.mxu0 0.0
      %760 = vmatprep.subr.mxu0 0.0
      %761 = vmatpush2.msra.mxu0 0.0
      %762 = vmatprep.subr.mxu0 0.0
      %763 = vmatpush2.msra.mxu0 0.0
      %764 = vmatprep.mubr.f32.mxu0 0.0
      %765 = vmatmul.mubr.f32.gmra.mxu0 %v691
      %v766 = vpop.f32.mrf.mxu0
      %v767 = vadd.f32 %v687, %v766
      %v768 = vpop.f32.mrf.mxu0
      %v769 = vadd.f32 %v687, %v768
      %770 = vdwg.mxu0
      %v771 = vmax.f32 %v767, 0.0
      %v772 = vmax.f32 %v769, 0.0
      %v773 = vld [vmem:[%s8] sm:$0xff]
      %v774 = vld [vmem:[%s8 + $0x8] sm:$0xff]
      %vm775 = vcmask 31744
      %v777 = vsel %vm775, %v773, 0
      %v780 = vsel %vm775, %v774, 0
      %v783 = vsel %vm693, %v771, 0
      %v786 = vsel %vm693, %v772, 0
      %788 = vmatprep.subr.mxu0 0.0
      %789 = vmatpush1.msra.mxu0 0.0
      %790 = vmatprep.subr.mxu0 0.0
      %791 = vmatpush1.msra.mxu0 0.0
      %792 = vmatprep.subr.mxu0 0.0
      %793 = vmatpush1.msra.mxu0 0.0
      %794 = vmatprep.subr.mxu0 0.0
      %795 = vmatpush1.msra.mxu0 0.0
      %796 = vmatprep.subr.mxu0 0.0
      %797 = vmatpush1.msra.mxu0 0.0
      %798 = vmatprep.subr.mxu0 0.0
      %799 = vmatpush1.msra.mxu0 0.0
      %800 = vmatprep.subr.mxu0 0.0
      %801 = vmatpush1.msra.mxu0 0.0
      %802 = vmatprep.subr.mxu0 0.0
      %803 = vmatpush1.msra.mxu0 0.0
      %804 = vmatprep.subr.mxu0 0.0
      %805 = vmatpush1.msra.mxu0 0.0
      %806 = vmatprep.subr.mxu0 0.0
      %807 = vmatpush1.msra.mxu0 0.0
      %808 = vmatprep.subr.mxu0 0.0
      %809 = vmatpush1.msra.mxu0 0.0
      %810 = vmatprep.subr.mxu0 0.0
      %811 = vmatpush1.msra.mxu0 0.0
      %812 = vmatprep.subr.mxu0 0.0
      %813 = vmatpush1.msra.mxu0 0.0
      %814 = vmatprep.subr.mxu0 0.0
      %815 = vmatpush1.msra.mxu0 0.0
      %816 = vmatprep.subr.mxu0 0.0
      %817 = vmatpush1.msra.mxu0 0.0
      %818 = vmatprep.subr.mxu0 %v786
      %819 = vmatpush1.msra.mxu0 %v783
      %820 = vmatprep.subr.mxu0 0.0
      %821 = vmatpush2.msra.mxu0 0.0
      %822 = vmatprep.subr.mxu0 0.0
      %823 = vmatpush2.msra.mxu0 0.0
      %824 = vmatprep.subr.mxu0 0.0
      %825 = vmatpush2.msra.mxu0 0.0
      %826 = vmatprep.subr.mxu0 0.0
      %827 = vmatpush2.msra.mxu0 0.0
      %828 = vmatprep.subr.mxu0 0.0
      %829 = vmatpush2.msra.mxu0 0.0
      %830 = vmatprep.subr.mxu0 0.0
      %831 = vmatpush2.msra.mxu0 0.0
      %832 = vmatprep.subr.mxu0 0.0
      %833 = vmatpush2.msra.mxu0 0.0
      %834 = vmatprep.subr.mxu0 0.0
      %835 = vmatpush2.msra.mxu0 0.0
      %836 = vmatprep.subr.mxu0 0.0
      %837 = vmatpush2.msra.mxu0 0.0
      %838 = vmatprep.subr.mxu0 0.0
      %839 = vmatpush2.msra.mxu0 0.0
      %840 = vmatprep.subr.mxu0 0.0
      %841 = vmatpush2.msra.mxu0 0.0
      %842 = vmatprep.subr.mxu0 0.0
      %843 = vmatpush2.msra.mxu0 0.0
      %844 = vmatprep.subr.mxu0 0.0
      %845 = vmatpush2.msra.mxu0 0.0
      %846 = vmatprep.subr.mxu0 0.0
      %847 = vmatpush2.msra.mxu0 0.0
      %848 = vmatprep.subr.mxu0 0.0
      %849 = vmatpush2.msra.mxu0 0.0
      %850 = vmatprep.subr.mxu0 0.0
      %851 = vmatpush2.msra.mxu0 0.0
      %852 = vmatprep.mubr.f32.mxu0 0.0
      %853 = vmatmul.mubr.f32.gmra.mxu0 %v777
      %v854 = vpop.f32.mrf.mxu0
      %v855 = vadd.f32 %v333, %v854
      %v856 = vpop.f32.mrf.mxu0
      %v857 = vadd.f32 %v334, %v856
      %858 = vmatprep.mubr.f32.mxu0 0.0
      %859 = vmatmul.mubr.f32.gmra.mxu0 %v780
      %v860 = vpop.f32.mrf.mxu0
      %v861 = vadd.f32 %v335, %v860
      %v862 = vpop.f32.mrf.mxu0
      %v863 = vadd.f32 %v336, %v862
      %864 = vdwg.mxu0
      %865 = vst [vmem:[%s332] sm:$0xff] %v855
      %866 = vst [vmem:[%s332 + $0x8] sm:$0xff] %v857
      %867 = vst [vmem:[%s332 + $0x10] sm:$0xff] %v861
      %868 = vst [vmem:[%s332 + $0x18] sm:$0xff] %v863
      %p869 = scmp.lt.s32.totalorder %s20, 1
      %s870 = scalar_select %p869, %s20, 1
      %s871 = smul.addr %s870, 4
      %s872 = smul.addr %s871, 8
      %s873 = scalar_lea.vmem %s9, %s872
      // Predicated region
      $region57: #{bottleneck_v2.1} parent=55 // pred_check
        %p874 = pneg %p232
      $region58: #{bottleneck_v2.1} parent=55 // pred_check_branch
        %876 = sbr.rel (%p874) target = $region60
      $region59: #{bottleneck_v2.1} parent=55 // pred_region
        _
      $region60: #{bottleneck_v2.1} parent=55 // pred_fallthru
        _
    $region56: #{bottleneck_v2.1} parent=5 // pred_fallthru
      _
    %p877 = scmp.le.s32.totalorder 2, %s15
    // Predicated region
    $region61: #{bottleneck_v2.1} parent=5 // pred_check
      %p878 = pneg %p877
    $region62: #{bottleneck_v2.1} parent=5 // pred_check_branch
      %880 = sbr.rel (%p878) target = $region64
    $region63: #{bottleneck_v2.1} parent=5 // pred_region
      %s881 = ssub.s32 %s15, 2
      // Predicated region
      $region65: #{bottleneck_v2.1} parent=63 // pred_check
        %p882 = pneg %p238
      $region66: #{bottleneck_v2.1} parent=63 // pred_check_branch
        %884 = sbr.rel (%p882) target = $region68
      $region67: #{bottleneck_v2.1} parent=63 // pred_region
        %p885 = scmp.lt.s32.totalorder %s21, 1
        %s886 = scalar_select %p885, %s21, 1
        %s887 = smul.addr %s886, 4
        %s888 = smul.addr %s887, 8
        %s889 = scalar_lea.vmem %s9, %s888
      $region68: #{bottleneck_v2.1} parent=63 // pred_fallthru
        _
    $region64: #{bottleneck_v2.1} parent=5 // pred_fallthru
      _
  $region6: #{bottleneck_v2.1} parent=0 // loop_footer
    %s19 = sadd.s32 1, %s15
  $region7: #{bottleneck_v2.1} parent=0 // loop_footer_branch
    %14 = sbr.rel target = $region3
  $region8: #{bottleneck_v2.1} parent=0 // loop_exit
    _

</llo_original>
